<compile_context>
chip_gen: v7x
topology: tpu7x:2x2x1
jax: 0.10.0
libtpu: 0.0.40
codegen_flags: <defaults>
</compile_context>

<pallas_src>
import functools

import numpy as np
import jax
import jax.numpy as jnp
from jax.experimental import pallas as pl
from jax.experimental.pallas import tpu as pltpu


# --------------------------------------------------------------------------- #
# Host-side helpers
# --------------------------------------------------------------------------- #
def _same_pad(L_in, K, stride):
    """Padding exactly as MyConv1dPadSame / MyMaxPool1dPadSame compute it."""
    out_dim = (L_in + stride - 1) // stride
    p = max(0, (out_dim - 1) * stride + K - L_in)
    return p // 2, p - p // 2


# --------------------------------------------------------------------------- #
# Pallas kernel: one (batch, position-tile) block of the fused conv-conv core
# --------------------------------------------------------------------------- #
def basic_block_kernel(x1_ref, w1_ref, b1_ref, w2_ref, b2_ref, id_ref, out_ref,
                       *, K, T, L1, pad2_l):
    # conv1 (+ conv1 bias + BN2 folded into w1/b1) + ReLU, over W1 = T+K-1
    # positions: the T outputs of this tile plus the K-1 halo rows conv2 needs.
    h1 = jnp.dot(x1_ref[0, 0], w1_ref[...],
                 preferred_element_type=jnp.float32) + b1_ref[...]
    h1 = jnp.maximum(h1, 0.0)                                   # (W1, C_out) f32

    # Rows whose conv1-output position falls outside [0, L1) are conv2's SAME
    # padding: force them to zero (the folded bias would otherwise leak in).
    if K > 1:
        W1 = T + K - 1
        j = pl.program_id(1)
        r = jax.lax.broadcasted_iota(jnp.int32, (W1, 1), 0)
        p = j * T - pad2_l + r
        h1 = jnp.where(jnp.logical_and(p >= 0, p < L1), h1, 0.0)

    h1 = h1.astype(w2_ref.dtype)                                # bf16 for the MXU

    # conv2 (stride 1): K shifted (T, C_out) @ (C_out, C_out) matmuls, f32 acc.
    acc = jnp.dot(h1[0:T, :], w2_ref[0], preferred_element_type=jnp.float32)
    for k in range(1, K):
        acc = acc + jnp.dot(h1[k:k + T, :], w2_ref[k],
                            preferred_element_type=jnp.float32)

    # conv2 bias + residual identity (kept exact in f32), single store.
    out_ref[0] = (acc + b2_ref[...] + id_ref[0]).astype(out_ref.dtype)


# --------------------------------------------------------------------------- #
# Wrapper
# --------------------------------------------------------------------------- #
def basic_block_forward(x, params, cfg, *, compute_dtype=jnp.bfloat16,
                        tile_positions=128):
    """x: (B, C_in, L) float32 (PyTorch layout). Returns (B, C_out, L_out)."""
    B, C_in, L = x.shape
    C_out = cfg["out_channels"]
    K = cfg["kernel_size"]
    s = cfg["stride"] if cfg["downsample"] else 1
    assert cfg["groups"] == 1  # TODO(synk): grouped conv not implemented
    eps = 1e-5

    # ---- wrapper-side prep: cheap O(B*L*C) elementwise / layout work --------
    x_cl = jnp.transpose(x, (0, 2, 1)).astype(jnp.float32)      # (B, L, C_in)

    # BN1 (eval, running stats) + ReLU1 (+ eval-mode Dropout = identity),
    # applied before im2col so the conv SAME-pad zeros stay exactly zero.
    y = x_cl
    if not cfg["is_first_block"]:
        if cfg["use_bn"]:
            s1 = params["bn1_gamma"] / jnp.sqrt(params["bn1_var"] + eps)
            t1 = params["bn1_beta"] - params["bn1_mean"] * s1
            y = y * s1[None, None, :] + t1[None, None, :]
        y = jnp.maximum(y, 0.0)

    # conv1 SAME pad + im2col (tap-major, channel-minor) -> (B, L1, K*C_in).
    pad1_l, pad1_r = _same_pad(L, K, s)
    L1 = (L + s - 1) // s
    ypad = jnp.pad(y, ((0, 0), (pad1_l, pad1_r), (0, 0)))
    cols = [ypad[:, k::s, :][:, :L1, :] for k in range(K)]
    x1 = jnp.stack(cols, axis=2).reshape(B, L1, K * C_in)

    # Position tiling over conv2 output positions, K-1 halo rows per tile.
    T = tile_positions if L1 >= tile_positions else L1          # T%8==0 when NT>1
    NT = -(-L1 // T)
    L1p = NT * T
    W1 = T + K - 1
    pad2_l, pad2_r = _same_pad(L1, K, 1)

    x1p = jnp.pad(x1, ((0, 0), (pad2_l, L1p - L1 + pad2_r), (0, 0)))
    x1t = jnp.stack([x1p[:, j * T: j * T + W1, :] for j in range(NT)], axis=1)
    x1t = x1t.astype(compute_dtype)                      # (B, NT, W1, K*C_in)

    # conv1 weight with conv1 bias + BN2 folded in (exact).
    w1m = jnp.transpose(params["conv1_w"], (2, 1, 0)).reshape(K * C_in, C_out)
    if cfg["use_bn"]:
        s2 = params["bn2_gamma"] / jnp.sqrt(params["bn2_var"] + eps)
        t2 = params["bn2_beta"] - params["bn2_mean"] * s2
    else:
        s2 = jnp.ones((C_out,), jnp.float32)
        t2 = jnp.zeros((C_out,), jnp.float32)
    w1f = (w1m * s2[None, :]).astype(compute_dtype)               # (K*C_in, C_out)
    b1f = (params["conv1_b"] * s2 + t2).reshape(1, C_out).astype(jnp.float32)

    # conv2 weights as K per-tap (C_out, C_out) matrices; bias kept f32.
    w2m = jnp.transpose(params["conv2_w"], (2, 1, 0)).astype(compute_dtype)
    b2 = params["conv2_b"].reshape(1, C_out).astype(jnp.float32)

    # Identity path: SAME max-pool (if downsampling) + centered channel pad.
    # Done here with cheap ops — no dense scatter matrix, no MXU work.
    ident = x.astype(jnp.float32)
    if cfg["downsample"]:
        pl_l, pl_r = _same_pad(L, s, 1)
        ip = jnp.pad(ident, ((0, 0), (0, 0), (pl_l, pl_r)))
        ident = jax.lax.reduce_window(ip, -jnp.inf, jax.lax.max,
                                      (1, 1, s), (1, 1, s), "VALID")
    if C_out != C_in:
        ch1 = (C_out - C_in) // 2
        ch2 = C_out - C_in - ch1
        ident = jnp.pad(ident, ((0, 0), (ch1, ch2), (0, 0)))
    assert ident.shape == (B, C_out, L1)
    ident = jnp.transpose(ident, (0, 2, 1))                       # (B, L1, C_out)
    ident = jnp.pad(ident, ((0, 0), (0, L1p - L1), (0, 0)))

    kernel = functools.partial(basic_block_kernel, K=K, T=T, L1=L1,
                               pad2_l=pad2_l)
    out = pl.pallas_call(
        kernel,
        out_shape=jax.ShapeDtypeStruct((B, L1p, C_out), jnp.float32),
        grid=(B, NT),
        in_specs=[
            pl.BlockSpec((1, 1, W1, K * C_in), lambda b, j: (b, j, 0, 0)),
            pl.BlockSpec((K * C_in, C_out), lambda b, j: (0, 0)),
            pl.BlockSpec((1, C_out), lambda b, j: (0, 0)),
            pl.BlockSpec((K, C_out, C_out), lambda b, j: (0, 0, 0)),
            pl.BlockSpec((1, C_out), lambda b, j: (0, 0)),
            pl.BlockSpec((1, T, C_out), lambda b, j: (b, j, 0)),
        ],
        out_specs=pl.BlockSpec((1, T, C_out), lambda b, j: (b, j, 0)),
        compiler_params=pltpu.CompilerParams(
            dimension_semantics=("parallel", "parallel"),
            vmem_limit_bytes=32 * 1024 * 1024),
    )(x1t, w1f, b1f, w2m, b2, ident)

    # Back to PyTorch layout (B, C_out, L_out).
    return jnp.transpose(out[:, :L1, :], (0, 2, 1))


# --------------------------------------------------------------------------- #
# Plain-JAX reference (mirrors the PyTorch forward, eval mode)
# --------------------------------------------------------------------------- #
def _bn_eval(x, gamma, beta, mean, var, eps=1e-5):
    inv = gamma / jnp.sqrt(var + eps)
    return (x - mean[None, :, None]) * inv[None, :, None] + beta[None, :, None]


def _conv1d_same(x, w, b, stride):
    pad_l, pad_r = _same_pad(x.shape[-1], w.shape[-1], stride)
    xp = jnp.pad(x, ((0, 0), (0, 0), (pad_l, pad_r)))
    y = jax.lax.conv_general_dilated(xp, w, window_strides=(stride,),
                                     padding="VALID",
                                     dimension_numbers=("NCH", "OIH", "NCH"))
    return y + b[None, :, None]


def _maxpool1d_same(x, kernel_size):
    pad_l, pad_r = _same_pad(x.shape[-1], kernel_size, 1)
    xp = jnp.pad(x, ((0, 0), (0, 0), (pad_l, pad_r)))
    return jax.lax.reduce_window(xp, -jnp.inf, jax.lax.max,
                                 (1, 1, kernel_size), (1, 1, kernel_size), "VALID")


def basic_block_reference(x, params, cfg):
    eff_stride = cfg["stride"] if cfg["downsample"] else 1
    identity = x
    out = x
    if not cfg["is_first_block"]:
        if cfg["use_bn"]:
            out = _bn_eval(out, params["bn1_gamma"], params["bn1_beta"],
                           params["bn1_mean"], params["bn1_var"])
        out = jnp.maximum(out, 0.0)
    out = _conv1d_same(out, params["conv1_w"], params["conv1_b"], eff_stride)
    if cfg["use_bn"]:
        out = _bn_eval(out, params["bn2_gamma"], params["bn2_beta"],
                       params["bn2_mean"], params["bn2_var"])
    out = jnp.maximum(out, 0.0)
    out = _conv1d_same(out, params["conv2_w"], params["conv2_b"], 1)
    if cfg["downsample"]:
        identity = _maxpool1d_same(identity, eff_stride)
    if cfg["out_channels"] != cfg["in_channels"]:
        ch1 = (cfg["out_channels"] - cfg["in_channels"]) // 2
        ch2 = cfg["out_channels"] - cfg["in_channels"] - ch1
        identity = jnp.pad(identity, ((0, 0), (ch1, ch2), (0, 0)))
    return out + identity


# --------------------------------------------------------------------------- #
# Parameters (deterministic synthetic init)
# --------------------------------------------------------------------------- #
def init_params(key, cfg):
    C_in, C_out, K = cfg["in_channels"], cfg["out_channels"], cfg["kernel_size"]
    ks = jax.random.split(key, 12)
    sc1 = 1.0 / np.sqrt(C_in * K)
    sc2 = 1.0 / np.sqrt(C_out * K)
    return {
        "conv1_w": jax.random.normal(ks[0], (C_out, C_in, K), jnp.float32) * sc1,
        "conv1_b": jax.random.normal(ks[1], (C_out,), jnp.float32) * 0.05,
        "conv2_w": jax.random.normal(ks[2], (C_out, C_out, K), jnp.float32) * sc2,
        "conv2_b": jax.random.normal(ks[3], (C_out,), jnp.float32) * 0.05,
        "bn1_gamma": jax.random.uniform(ks[4], (C_in,), jnp.float32, 0.8, 1.2),
        "bn1_beta": jax.random.normal(ks[5], (C_in,), jnp.float32) * 0.1,
        "bn1_mean": jax.random.normal(ks[6], (C_in,), jnp.float32) * 0.1,
        "bn1_var": jax.random.uniform(ks[7], (C_in,), jnp.float32, 0.5, 1.5),
        "bn2_gamma": jax.random.uniform(ks[8], (C_out,), jnp.float32, 0.8, 1.2),
        "bn2_beta": jax.random.normal(ks[9], (C_out,), jnp.float32) * 0.1,
        "bn2_mean": jax.random.normal(ks[10], (C_out,), jnp.float32) * 0.1,
        "bn2_var": jax.random.uniform(ks[11], (C_out,), jnp.float32, 0.5, 1.5),
    }


if __name__ == "__main__":
    key = jax.random.PRNGKey(0)
    B, L = 2, 16

    configs = [
        # downsampling block with channel expansion (the common case)
        dict(in_channels=4, out_channels=8, kernel_size=3, stride=2, groups=1,
             downsample=True, use_bn=True, use_do=True, is_first_block=False),
        # first block: no pre-activation, no downsample, same channel count
        dict(in_channels=8, out_channels=8, kernel_size=5, stride=2, groups=1,
             downsample=False, use_bn=True, use_do=True, is_first_block=True),
    ]

    for cfg in configs:
        key, kx, kp = jax.random.split(key, 3)
        x = jax.random.normal(kx, (B, cfg["in_channels"], L), jnp.float32)
        params = init_params(kp, cfg)
        ref = basic_block_reference(x, params, cfg)

        # Exact f32 path (tight tolerance).
        fwd32 = jax.jit(functools.partial(basic_block_forward, cfg=cfg,
                                          compute_dtype=jnp.float32))
        out32 = jax.block_until_ready(fwd32(x, params))
        assert out32.shape == ref.shape
        assert jnp.allclose(out32, ref, atol=1e-4, rtol=1e-4), float(
            jnp.max(jnp.abs(out32 - ref)))

        # bf16-MXU path (quantization-level tolerance; identity path stays exact).
        fwd16 = jax.jit(functools.partial(basic_block_forward, cfg=cfg,
                                          compute_dtype=jnp.bfloat16))
        out16 = jax.block_until_ready(fwd16(x, params))
        assert out16.shape == ref.shape
        assert jnp.allclose(out16, ref, atol=5e-2, rtol=5e-2), float(
            jnp.max(jnp.abs(out16 - ref)))

    print("KERNEL_OK")
</pallas_src>

<mosaic_0001>
module attributes {stable_mosaic.version = 11 : i64} {
  func.func @basic_block_kernel(%arg0: i32, %arg1: i32, %arg2: memref<1x1x10x12xf32, #tpu.memory_space<vmem>>, %arg3: memref<12x8xf32, #tpu.memory_space<vmem>>, %arg4: memref<1x8xf32, #tpu.memory_space<vmem>>, %arg5: memref<3x8x8xf32, #tpu.memory_space<vmem>>, %arg6: memref<1x8xf32, #tpu.memory_space<vmem>>, %arg7: memref<1x8x8xf32, #tpu.memory_space<vmem>>, %arg8: memref<1x8x8xf32, #tpu.memory_space<vmem>>) attributes {dimension_semantics = [#tpu.dimension_semantics<parallel>, #tpu.dimension_semantics<parallel>], iteration_bounds = array<i64: 2, 1>, scalar_prefetch = 0 : i64, scratch_operands = 0 : i64, tpu.core_type = #tpu.core_type<tc>, window_params = [{transform_indices = @transform_0, window_bounds = array<i64: 1, 1, 10, 12>}, {pipeline_mode = #tpu.pipeline_mode<synchronous>, transform_indices = @transform_1, window_bounds = array<i64: 12, 8>}, {pipeline_mode = #tpu.pipeline_mode<synchronous>, transform_indices = @transform_2, window_bounds = array<i64: 1, 8>}, {pipeline_mode = #tpu.pipeline_mode<synchronous>, transform_indices = @transform_3, window_bounds = array<i64: 3, 8, 8>}, {pipeline_mode = #tpu.pipeline_mode<synchronous>, transform_indices = @transform_4, window_bounds = array<i64: 1, 8>}, {transform_indices = @transform_5, window_bounds = array<i64: 1, 8, 8>}, {transform_indices = @transform_6, window_bounds = array<i64: 1, 8, 8>}]} {
    %c0 = arith.constant 0 : index
    %c0_0 = arith.constant 0 : index
    %c0_1 = arith.constant 0 : index
    %c0_2 = arith.constant 0 : index
    %0 = vector.load %arg2[%c0, %c0_0, %c0_1, %c0_2] : memref<1x1x10x12xf32, #tpu.memory_space<vmem>>, vector<1x1x10x12xf32>
    %1 = vector.shape_cast %0 : vector<1x1x10x12xf32> to vector<10x12xf32>
    %c0_3 = arith.constant 0 : index
    %c0_4 = arith.constant 0 : index
    %2 = vector.load %arg3[%c0_3, %c0_4] : memref<12x8xf32, #tpu.memory_space<vmem>>, vector<12x8xf32>
    %cst = arith.constant dense<0.000000e+00> : vector<10x8xf32>
    %3 = tpu.matmul %1, %2, %cst {dimension_numbers = #tpu.dot_dimension_numbers<[1], [0], [0], [1], [0, 0, 1, 1], [], []>} : vector<10x12xf32>, vector<12x8xf32>, vector<10x8xf32> -> vector<10x8xf32>
    %c0_5 = arith.constant 0 : index
    %c0_6 = arith.constant 0 : index
    %4 = vector.load %arg4[%c0_5, %c0_6] : memref<1x8xf32, #tpu.memory_space<vmem>>, vector<1x8xf32>
    %5 = vector.broadcast %4 : vector<1x8xf32> to vector<10x8xf32>
    %6 = arith.addf %3, %5 : vector<10x8xf32>
    %cst_7 = arith.constant 0.000000e+00 : f32
    %7 = vector.broadcast %cst_7 : f32 to vector<10x8xf32>
    %8 = arith.maximumf %6, %7 : vector<10x8xf32>
    %9 = tpu.iota {dimensions = array<i32: 0>} : vector<10x1xi32>
    %c8_i32 = arith.constant 8 : i32
    %10 = arith.muli %arg1, %c8_i32 : i32
    %c1_i32 = arith.constant 1 : i32
    %11 = arith.subi %10, %c1_i32 : i32
    %12 = vector.broadcast %11 : i32 to vector<10x1xi32>
    %13 = arith.addi %12, %9 : vector<10x1xi32>
    %c0_i32 = arith.constant 0 : i32
    %14 = vector.broadcast %c0_i32 : i32 to vector<10x1xi32>
    %15 = arith.cmpi sge, %13, %14 : vector<10x1xi32>
    %c8_i32_8 = arith.constant 8 : i32
    %16 = vector.broadcast %c8_i32_8 : i32 to vector<10x1xi32>
    %17 = arith.cmpi slt, %13, %16 : vector<10x1xi32>
    %18 = arith.andi %15, %17 : vector<10x1xi1>
    %cst_9 = arith.constant 0.000000e+00 : f32
    %19 = vector.shape_cast %18 : vector<10x1xi1> to vector<10x1xi1>
    %20 = vector.broadcast %19 : vector<10x1xi1> to vector<10x8xi1>
    %21 = vector.broadcast %cst_9 : f32 to vector<10x8xf32>
    %22 = arith.select %20, %8, %21 : vector<10x8xi1>, vector<10x8xf32>
    %23 = vector.extract_strided_slice %22 {offsets = [0, 0], sizes = [8, 8], strides = [1, 1]} : vector<10x8xf32> to vector<8x8xf32>
    %c0_10 = arith.constant 0 : index
    %c0_11 = arith.constant 0 : index
    %c0_12 = arith.constant 0 : index
    %24 = vector.load %arg5[%c0_10, %c0_11, %c0_12] : memref<3x8x8xf32, #tpu.memory_space<vmem>>, vector<1x8x8xf32>
    %25 = vector.shape_cast %24 : vector<1x8x8xf32> to vector<8x8xf32>
    %cst_13 = arith.constant dense<0.000000e+00> : vector<8x8xf32>
    %26 = tpu.matmul %23, %25, %cst_13 {dimension_numbers = #tpu.dot_dimension_numbers<[1], [0], [0], [1], [0, 0, 1, 1], [], []>} : vector<8x8xf32>, vector<8x8xf32>, vector<8x8xf32> -> vector<8x8xf32>
    %27 = vector.extract_strided_slice %22 {offsets = [1, 0], sizes = [8, 8], strides = [1, 1]} : vector<10x8xf32> to vector<8x8xf32>
    %c1 = arith.constant 1 : index
    %c0_14 = arith.constant 0 : index
    %c0_15 = arith.constant 0 : index
    %28 = vector.load %arg5[%c1, %c0_14, %c0_15] : memref<3x8x8xf32, #tpu.memory_space<vmem>>, vector<1x8x8xf32>
    %29 = vector.shape_cast %28 : vector<1x8x8xf32> to vector<8x8xf32>
    %cst_16 = arith.constant dense<0.000000e+00> : vector<8x8xf32>
    %30 = tpu.matmul %27, %29, %cst_16 {dimension_numbers = #tpu.dot_dimension_numbers<[1], [0], [0], [1], [0, 0, 1, 1], [], []>} : vector<8x8xf32>, vector<8x8xf32>, vector<8x8xf32> -> vector<8x8xf32>
    %31 = arith.addf %26, %30 : vector<8x8xf32>
    %32 = vector.extract_strided_slice %22 {offsets = [2, 0], sizes = [8, 8], strides = [1, 1]} : vector<10x8xf32> to vector<8x8xf32>
    %c2 = arith.constant 2 : index
    %c0_17 = arith.constant 0 : index
    %c0_18 = arith.constant 0 : index
    %33 = vector.load %arg5[%c2, %c0_17, %c0_18] : memref<3x8x8xf32, #tpu.memory_space<vmem>>, vector<1x8x8xf32>
    %34 = vector.shape_cast %33 : vector<1x8x8xf32> to vector<8x8xf32>
    %cst_19 = arith.constant dense<0.000000e+00> : vector<8x8xf32>
    %35 = tpu.matmul %32, %34, %cst_19 {dimension_numbers = #tpu.dot_dimension_numbers<[1], [0], [0], [1], [0, 0, 1, 1], [], []>} : vector<8x8xf32>, vector<8x8xf32>, vector<8x8xf32> -> vector<8x8xf32>
    %36 = arith.addf %31, %35 : vector<8x8xf32>
    %c0_20 = arith.constant 0 : index
    %c0_21 = arith.constant 0 : index
    %37 = vector.load %arg6[%c0_20, %c0_21] : memref<1x8xf32, #tpu.memory_space<vmem>>, vector<1x8xf32>
    %38 = vector.broadcast %37 : vector<1x8xf32> to vector<8x8xf32>
    %39 = arith.addf %36, %38 : vector<8x8xf32>
    %c0_22 = arith.constant 0 : index
    %c0_23 = arith.constant 0 : index
    %c0_24 = arith.constant 0 : index
    %40 = vector.load %arg7[%c0_22, %c0_23, %c0_24] : memref<1x8x8xf32, #tpu.memory_space<vmem>>, vector<1x8x8xf32>
    %41 = vector.shape_cast %40 : vector<1x8x8xf32> to vector<8x8xf32>
    %42 = arith.addf %39, %41 : vector<8x8xf32>
    %c0_25 = arith.constant 0 : index
    %c0_26 = arith.constant 0 : index
    %c0_27 = arith.constant 0 : index
    %43 = vector.load %arg8[%c0_25, %c0_26, %c0_27] : memref<1x8x8xf32, #tpu.memory_space<vmem>>, vector<1x8x8xf32>
    %44 = vector.shape_cast %43 : vector<1x8x8xf32> to vector<8x8xf32>
    %45 = vector.shape_cast %42 : vector<8x8xf32> to vector<1x8x8xf32>
    tpu.vector_store %arg8[%c0_25, %c0_26, %c0_27], %45 {strides = array<i32>} : memref<1x8x8xf32, #tpu.memory_space<vmem>>, vector<1x8x8xf32>,
    return
  }
  func.func @transform_0(%arg0: i32, %arg1: i32) -> (i32, i32, i32, i32) {
    %c0_i32 = arith.constant 0 : i32
    %c0_i32_0 = arith.constant 0 : i32
    %c0_i32_1 = arith.constant 0 : i32
    return %arg0, %arg1, %c0_i32, %c0_i32_0 : i32, i32, i32, i32
  }
  func.func @transform_1(%arg0: i32, %arg1: i32) -> (i32, i32) {
    %c0_i32 = arith.constant 0 : i32
    %c0_i32_0 = arith.constant 0 : i32
    %c0_i32_1 = arith.constant 0 : i32
    return %c0_i32, %c0_i32_0 : i32, i32
  }
  func.func @transform_2(%arg0: i32, %arg1: i32) -> (i32, i32) {
    %c0_i32 = arith.constant 0 : i32
    %c0_i32_0 = arith.constant 0 : i32
    %c0_i32_1 = arith.constant 0 : i32
    return %c0_i32, %c0_i32_0 : i32, i32
  }
  func.func @transform_3(%arg0: i32, %arg1: i32) -> (i32, i32, i32) {
    %c0_i32 = arith.constant 0 : i32
    %c0_i32_0 = arith.constant 0 : i32
    %c0_i32_1 = arith.constant 0 : i32
    %c0_i32_2 = arith.constant 0 : i32
    return %c0_i32, %c0_i32_0, %c0_i32_1 : i32, i32, i32
  }
  func.func @transform_4(%arg0: i32, %arg1: i32) -> (i32, i32) {
    %c0_i32 = arith.constant 0 : i32
    %c0_i32_0 = arith.constant 0 : i32
    %c0_i32_1 = arith.constant 0 : i32
    return %c0_i32, %c0_i32_0 : i32, i32
  }
  func.func @transform_5(%arg0: i32, %arg1: i32) -> (i32, i32, i32) {
    %c0_i32 = arith.constant 0 : i32
    %c0_i32_0 = arith.constant 0 : i32
    return %arg0, %arg1, %c0_i32 : i32, i32, i32
  }
  func.func @transform_6(%arg0: i32, %arg1: i32) -> (i32, i32, i32) {
    %c0_i32 = arith.constant 0 : i32
    %c0_i32_0 = arith.constant 0 : i32
    return %arg0, %arg1, %c0_i32 : i32, i32, i32
  }
}

</mosaic_0001>

<llo_original>
// kernel: basic_block_forward.1
$region0: #{basic_block_forward.1}
  #allocation0 [shape = 'u32[]', space=smem, size = 0x4, offset = 0x4, fixed_abs, tag = 'smem constant byte address 0x4 - core index']
  #allocation1 [shape = 'u32[144,128]{1,0:T(1,128)}', space=vmem, size = 0x12000, scoped, tag = 'internal scratch']
  %s0 = inlined_call_operand.vmem [shape: f32[2,1,10,12], index: 0, kind: input, shape index: {}]
  %s1 = inlined_call_operand.vmem [shape: f32[12,8], index: 1, kind: input, shape index: {}]
  %s2 = inlined_call_operand.vmem [shape: f32[1,8], index: 2, kind: input, shape index: {}]
  %s3 = inlined_call_operand.vmem [shape: f32[3,8,8], index: 3, kind: input, shape index: {}]
  %s4 = inlined_call_operand.vmem [shape: f32[1,8], index: 4, kind: input, shape index: {}]
  %s5 = inlined_call_operand.vmem [shape: f32[2,8,8], index: 5, kind: input, shape index: {}]
  %s6 = inlined_call_operand.vmem [shape: f32[2,8,8], index: 6, kind: output, shape index: {}]
  %s7 = sld [smem:[#allocation0]]
  $region57: #{basic_block_forward.1} parent=0
    _
  %s9 = ssub.s32 1, %s7
  %s10 = scalar_select 0, %s9, %s7
  loop: start=0, step=1, limit=4
  $region2: #{basic_block_forward.1} parent=0 // loop_pre_header
    _
  $region3: #{basic_block_forward.1} parent=0 // loop_header
    %s12 = sphi 0, %s16
    %p13 = scmp.ge.s32.totalorder %s12, 4
    %s19 = sphi 0, %s31
    %s20 = sphi 0, %s27
    %s21 = sphi 0, %s19
    %s22 = sphi 0, %s20
    %s23 = sphi 0, %s21
    %s24 = sphi 0, %s22
    %s36 = sphi 0, %s38
    %s39 = sphi 0, %s36
    %s40 = sphi 0, %s39
    %s56 = sphi 0, %s40
    %s60 = sphi 0, %s60
    %s62 = sphi 0, %s60
    %s63 = sphi 0, %s62
    %s77 = sphi 0, %s63
    %s81 = sphi 0, %s81
    %s83 = sphi 0, %s81
    %s84 = sphi 0, %s83
    %s98 = sphi 0, %s84
    %s102 = sphi 0, %s102
    %s104 = sphi 0, %s102
    %s105 = sphi 0, %s104
    %s119 = sphi 0, %s105
    %s123 = sphi 0, %s123
    %s125 = sphi 0, %s123
    %s126 = sphi 0, %s125
    %s140 = sphi 0, %s126
    %s148 = sphi 0, %s150
    %s151 = sphi 0, %s148
    %s152 = sphi 0, %s151
    %s168 = sphi 0, %s152
    %s176 = sphi 0, %s178
    %s179 = sphi 0, %s176
    %s180 = sphi 0, %s179
    %s196 = sphi 0, %s180
  $region4: #{basic_block_forward.1} parent=0 // loop_header_branch
    %15 = sbr.rel (%p13) target = $region8
  $region5: #{basic_block_forward.1} parent=0 // loop_body
    %s17 = ssub.s32 %s12, 1
    %s18 = ssub.s32 %s12, 2
    %s25 = sadd.s32 1, %s20
    %p26 = scmp.ge.s32.totalorder %s25, 1
    %s27 = scalar_select %p26, 0, %s25
    %s28 = sadd.s32 1, %s19
    %s29 = scalar_select %p26, %s28, %s19
    %p30 = scmp.ge.s32.totalorder %s29, 2
    %s31 = scalar_select %p30, 0, %s29
    %s32 = ssub.s32 %s19, %s31
    %s33 = ssub.s32 %s20, %s27
    %s34 = sor.u32 %s32, %s33
    %p35 = scmp.eq.s32.totalorder %s34, 0
    %s37 = sadd.s32 %s36, 1
    %s38 = scalar_select %p35, %s36, %s37
    %p41 = pneg %p35
    %p42 = scmp.eq.s32.totalorder %s12, 1
    %p43 = por %p41, %p42
    %p44 = scmp.ne.s32.totalorder %s36, %s39
    %p45 = scmp.eq.s32.totalorder %s12, 0
    %p46 = por %p44, %p45
    %p47 = scmp.ne.s32.totalorder %s36, %s39
    %p48 = scmp.eq.s32.totalorder %s17, 1
    %p49 = por %p47, %p48
    %p50 = scmp.ne.s32.totalorder %s39, %s40
    %p51 = scmp.eq.s32.totalorder %s17, 0
    %p52 = por %p50, %p51
    %p53 = scmp.ne.s32.totalorder %s39, %s40
    %p54 = scmp.eq.s32.totalorder %s18, 1
    %p55 = por %p53, %p54
    %p57 = scmp.ne.s32.totalorder %s40, %s56
    %p58 = scmp.eq.s32.totalorder %s18, 0
    %p59 = por %p57, %p58
    %s61 = sadd.s32 %s60, 1
    %p64 = scmp.eq.s32.totalorder %s12, 1
    %p65 = scmp.ne.s32.totalorder %s60, %s62
    %p66 = scmp.eq.s32.totalorder %s12, 0
    %p67 = por %p65, %p66
    %p68 = scmp.ne.s32.totalorder %s60, %s62
    %p69 = scmp.eq.s32.totalorder %s17, 1
    %p70 = por %p68, %p69
    %p71 = scmp.ne.s32.totalorder %s62, %s63
    %p72 = scmp.eq.s32.totalorder %s17, 0
    %p73 = por %p71, %p72
    %p74 = scmp.ne.s32.totalorder %s62, %s63
    %p75 = scmp.eq.s32.totalorder %s18, 1
    %p76 = por %p74, %p75
    %p78 = scmp.ne.s32.totalorder %s63, %s77
    %p79 = scmp.eq.s32.totalorder %s18, 0
    %p80 = por %p78, %p79
    %s82 = sadd.s32 %s81, 1
    %p85 = scmp.eq.s32.totalorder %s12, 1
    %p86 = scmp.ne.s32.totalorder %s81, %s83
    %p87 = scmp.eq.s32.totalorder %s12, 0
    %p88 = por %p86, %p87
    %p89 = scmp.ne.s32.totalorder %s81, %s83
    %p90 = scmp.eq.s32.totalorder %s17, 1
    %p91 = por %p89, %p90
    %p92 = scmp.ne.s32.totalorder %s83, %s84
    %p93 = scmp.eq.s32.totalorder %s17, 0
    %p94 = por %p92, %p93
    %p95 = scmp.ne.s32.totalorder %s83, %s84
    %p96 = scmp.eq.s32.totalorder %s18, 1
    %p97 = por %p95, %p96
    %p99 = scmp.ne.s32.totalorder %s84, %s98
    %p100 = scmp.eq.s32.totalorder %s18, 0
    %p101 = por %p99, %p100
    %s103 = sadd.s32 %s102, 1
    %p106 = scmp.eq.s32.totalorder %s12, 1
    %p107 = scmp.ne.s32.totalorder %s102, %s104
    %p108 = scmp.eq.s32.totalorder %s12, 0
    %p109 = por %p107, %p108
    %p110 = scmp.ne.s32.totalorder %s102, %s104
    %p111 = scmp.eq.s32.totalorder %s17, 1
    %p112 = por %p110, %p111
    %p113 = scmp.ne.s32.totalorder %s104, %s105
    %p114 = scmp.eq.s32.totalorder %s17, 0
    %p115 = por %p113, %p114
    %p116 = scmp.ne.s32.totalorder %s104, %s105
    %p117 = scmp.eq.s32.totalorder %s18, 1
    %p118 = por %p116, %p117
    %p120 = scmp.ne.s32.totalorder %s105, %s119
    %p121 = scmp.eq.s32.totalorder %s18, 0
    %p122 = por %p120, %p121
    %s124 = sadd.s32 %s123, 1
    %p127 = scmp.eq.s32.totalorder %s12, 1
    %p128 = scmp.ne.s32.totalorder %s123, %s125
    %p129 = scmp.eq.s32.totalorder %s12, 0
    %p130 = por %p128, %p129
    %p131 = scmp.ne.s32.totalorder %s123, %s125
    %p132 = scmp.eq.s32.totalorder %s17, 1
    %p133 = por %p131, %p132
    %p134 = scmp.ne.s32.totalorder %s125, %s126
    %p135 = scmp.eq.s32.totalorder %s17, 0
    %p136 = por %p134, %p135
    %p137 = scmp.ne.s32.totalorder %s125, %s126
    %p138 = scmp.eq.s32.totalorder %s18, 1
    %p139 = por %p137, %p138
    %p141 = scmp.ne.s32.totalorder %s126, %s140
    %p142 = scmp.eq.s32.totalorder %s18, 0
    %p143 = por %p141, %p142
    %s144 = ssub.s32 %s19, %s31
    %s145 = ssub.s32 %s20, %s27
    %s146 = sor.u32 %s144, %s145
    %p147 = scmp.eq.s32.totalorder %s146, 0
    %s149 = sadd.s32 %s148, 1
    %s150 = scalar_select %p147, %s148, %s149
    %p153 = pneg %p147
    %p154 = scmp.eq.s32.totalorder %s12, 1
    %p155 = por %p153, %p154
    %p156 = scmp.ne.s32.totalorder %s148, %s151
    %p157 = scmp.eq.s32.totalorder %s12, 0
    %p158 = por %p156, %p157
    %p159 = scmp.ne.s32.totalorder %s148, %s151
    %p160 = scmp.eq.s32.totalorder %s17, 1
    %p161 = por %p159, %p160
    %p162 = scmp.ne.s32.totalorder %s151, %s152
    %p163 = scmp.eq.s32.totalorder %s17, 0
    %p164 = por %p162, %p163
    %p165 = scmp.ne.s32.totalorder %s151, %s152
    %p166 = scmp.eq.s32.totalorder %s18, 1
    %p167 = por %p165, %p166
    %p169 = scmp.ne.s32.totalorder %s152, %s168
    %p170 = scmp.eq.s32.totalorder %s18, 0
    %p171 = por %p169, %p170
    %s172 = ssub.s32 %s19, %s31
    %s173 = ssub.s32 %s20, %s27
    %s174 = sor.u32 %s172, %s173
    %p175 = scmp.eq.s32.totalorder %s174, 0
    %s177 = sadd.s32 %s176, 1
    %s178 = scalar_select %p175, %s176, %s177
    %p181 = pneg %p175
    %p182 = scmp.eq.s32.totalorder %s12, 1
    %p183 = por %p181, %p182
    %p184 = scmp.ne.s32.totalorder %s176, %s179
    %p185 = scmp.eq.s32.totalorder %s12, 0
    %p186 = por %p184, %p185
    %p187 = scmp.ne.s32.totalorder %s176, %s179
    %p188 = scmp.eq.s32.totalorder %s17, 1
    %p189 = por %p187, %p188
    %p190 = scmp.ne.s32.totalorder %s179, %s180
    %p191 = scmp.eq.s32.totalorder %s17, 0
    %p192 = por %p190, %p191
    %p193 = scmp.ne.s32.totalorder %s179, %s180
    %p194 = scmp.eq.s32.totalorder %s18, 1
    %p195 = por %p193, %p194
    %p197 = scmp.ne.s32.totalorder %s180, %s196
    %p198 = scmp.eq.s32.totalorder %s18, 0
    %p199 = por %p197, %p198
    %p200 = scmp.le.s32.totalorder 1, %s12
    %p201 = scmp.lt.s32.totalorder %s12, 3
    %p202 = pnand %p200, %p201
    %p203 = pneg %p202
    // Predicated region
    $region9: #{basic_block_forward.1} parent=5 // pred_check
      _
    $region10: #{basic_block_forward.1} parent=5 // pred_check_branch
      %205 = sbr.rel (%p202) target = $region12
    $region11: #{basic_block_forward.1} parent=5 // pred_region
      %s206 = ssub.s32 %s12, 1
      // Predicated region
      $region13: #{basic_block_forward.1} parent=11 // pred_check
        %p207 = pneg %p73
      $region14: #{basic_block_forward.1} parent=11 // pred_check_branch
        %209 = sbr.rel (%p207) target = $region16
      $region15: #{basic_block_forward.1} parent=11 // pred_region
        _
      $region16: #{basic_block_forward.1} parent=11 // pred_fallthru
        _
      // Predicated region
      $region17: #{basic_block_forward.1} parent=11 // pred_check
        %p210 = pneg %p94
      $region18: #{basic_block_forward.1} parent=11 // pred_check_branch
        %212 = sbr.rel (%p210) target = $region20
      $region19: #{basic_block_forward.1} parent=11 // pred_region
        _
      $region20: #{basic_block_forward.1} parent=11 // pred_fallthru
        _
      // Predicated region
      $region21: #{basic_block_forward.1} parent=11 // pred_check
        %p213 = pneg %p115
      $region22: #{basic_block_forward.1} parent=11 // pred_check_branch
        %215 = sbr.rel (%p213) target = $region24
      $region23: #{basic_block_forward.1} parent=11 // pred_region
        _
      $region24: #{basic_block_forward.1} parent=11 // pred_fallthru
        _
      // Predicated region
      $region25: #{basic_block_forward.1} parent=11 // pred_check
        %p216 = pneg %p136
      $region26: #{basic_block_forward.1} parent=11 // pred_check_branch
        %218 = sbr.rel (%p216) target = $region28
      $region27: #{basic_block_forward.1} parent=11 // pred_region
        _
      $region28: #{basic_block_forward.1} parent=11 // pred_fallthru
        _
    $region12: #{basic_block_forward.1} parent=5 // pred_fallthru
      _
    %p219 = scmp.lt.s32.totalorder %s12, 2
    // Predicated region
    $region29: #{basic_block_forward.1} parent=5 // pred_check
      %p220 = pneg %p219
    $region30: #{basic_block_forward.1} parent=5 // pred_check_branch
      %222 = sbr.rel (%p220) target = $region32
    $region31: #{basic_block_forward.1} parent=5 // pred_region
      // Predicated region
      $region33: #{basic_block_forward.1} parent=31 // pred_check
        %p223 = pneg %p46
      $region34: #{basic_block_forward.1} parent=31 // pred_check_branch
        %225 = sbr.rel (%p223) target = $region36
      $region35: #{basic_block_forward.1} parent=31 // pred_region
        %p226 = scmp.lt.s32.totalorder %s19, 1
        %s227 = scalar_select %p226, %s19, 1
        %p228 = scmp.lt.s32.totalorder %s20, 0
        %s229 = scalar_select %p228, %s20, 0
        %s230 = smul.addr %s229, 2
        %s231 = smul.addr %s227, 2
        %s232 = sadd.s32 %s230, %s231
        %s233 = smul.addr %s232, 8
        %s234 = scalar_lea.vmem %s0, %s233
      $region36: #{basic_block_forward.1} parent=31 // pred_fallthru
        _
      // Predicated region
      $region37: #{basic_block_forward.1} parent=31 // pred_check
        %p235 = pneg %p158
      $region38: #{basic_block_forward.1} parent=31 // pred_check_branch
        %237 = sbr.rel (%p235) target = $region40
      $region39: #{basic_block_forward.1} parent=31 // pred_region
        %p238 = scmp.lt.s32.totalorder %s19, 1
        %s239 = scalar_select %p238, %s19, 1
        %p240 = scmp.lt.s32.totalorder %s20, 0
        %s241 = scalar_select %p240, %s20, 0
        %s242 = sadd.s32 %s241, %s239
        %s243 = smul.addr %s242, 8
        %s244 = scalar_lea.vmem %s5, %s243
      $region40: #{basic_block_forward.1} parent=31 // pred_fallthru
        _
    $region32: #{basic_block_forward.1} parent=5 // pred_fallthru
      _
    %p245 = scmp.le.s32.totalorder 1, %s12
    %p246 = scmp.lt.s32.totalorder %s12, 3
    %p247 = pnand %p245, %p246
    %p248 = pneg %p247
    // Predicated region
    $region41: #{basic_block_forward.1} parent=5 // pred_check
      _
    $region42: #{basic_block_forward.1} parent=5 // pred_check_branch
      %250 = sbr.rel (%p247) target = $region44
    $region43: #{basic_block_forward.1} parent=5 // pred_region
      %s251 = ssub.s32 %s12, 1
      %p252 = scmp.lt.s32.totalorder %s21, 1
      %s253 = scalar_select %p252, %s21, 1
      %p254 = scmp.lt.s32.totalorder %s22, 0
      %s255 = scalar_select %p254, %s22, 0
      %s256 = smul.addr %s255, 2
      %s257 = smul.addr %s253, 2
      %s258 = sadd.s32 %s256, %s257
      %s259 = smul.addr %s258, 8
      %s260 = scalar_lea.vmem %s0, %s259
      %p261 = pneg %p52
      %p262 = pneg %p49
      %p263 = pneg %p73
      %p264 = pneg %p70
      %p265 = pneg %p94
      %p266 = pneg %p91
      %p267 = pneg %p115
      %p268 = pneg %p112
      %p269 = pneg %p136
      %p270 = pneg %p133
      %p271 = scmp.lt.s32.totalorder %s21, 1
      %s272 = scalar_select %p271, %s21, 1
      %p273 = scmp.lt.s32.totalorder %s22, 0
      %s274 = scalar_select %p273, %s22, 0
      %s275 = sadd.s32 %s274, %s272
      %s276 = smul.addr %s275, 8
      %s277 = scalar_lea.vmem %s5, %s276
      %p278 = pneg %p164
      %p279 = pneg %p161
      %p280 = pneg %p192
      %p281 = pneg %p189
      %p282 = scmp.lt.s32.totalorder %s21, 1
      %s283 = scalar_select %p282, %s21, 1
      %p284 = scmp.lt.s32.totalorder %s22, 0
      %s285 = scalar_select %p284, %s22, 0
      %s286 = sadd.s32 %s285, %s283
      %s287 = smul.addr %s286, 8
      %s288 = scalar_lea.vmem %s6, %s287
      %p289 = scmp.lt.s32.totalorder %s21, 1
      %s290 = scalar_select %p289, %s21, 1
      %p291 = scmp.lt.s32.totalorder %s22, 0
      %s292 = scalar_select %p291, %s22, 0
      %s293 = smul.addr %s292, 2
      %s294 = smul.addr %s290, 2
      %s295 = sadd.s32 %s293, %s294
      %s296 = smul.addr %s295, 8
      %s297 = scalar_lea.vmem %s0, %s296
      %p298 = scmp.lt.s32.totalorder %s21, 1
      %s299 = scalar_select %p298, %s21, 1
      %p300 = scmp.lt.s32.totalorder %s22, 0
      %s301 = scalar_select %p300, %s22, 0
      %s302 = sadd.s32 %s301, %s299
      %s303 = smul.addr %s302, 8
      %s304 = scalar_lea.vmem %s5, %s303
      %p305 = scmp.lt.s32.totalorder %s21, 1
      %s306 = scalar_select %p305, %s21, 1
      %p307 = scmp.lt.s32.totalorder %s22, 0
      %s308 = scalar_select %p307, %s22, 0
      %s309 = sadd.s32 %s308, %s306
      %s310 = smul.addr %s309, 8
      %s311 = scalar_lea.vmem %s6, %s310
      %v312 = vld [vmem:[%s297] sm:$0xff]
      %v313 = vld [vmem:[%s297 + $0x8] sm:$0x3]
      %v314 = vld [vmem:[%s1] sm:$0xff]
      %v315 = vld [vmem:[%s1 + $0x8] sm:$0xf]
      %v316 = vld [vmem:[%s2] sm:$0x1]
      %v318 = vlaneseq
      %v319 = vshrl.u32 %v318, 7
      %v320 = vsub.s32 0, %v319
      %v321 = vrot.slane %v316, %v320
      %vm323 = vcmask 97280
      %v325 = vsel %vm323, %v312, 0
      %v328 = vsel %vm323, %v313, 0
      %vm330 = vcmask 1043456
      %v332 = vsel %vm330, %v315, 0
      %334 = vmatprep.subr.mxu0 0.0
      %335 = vmatpush1.msra.mxu0 %v314
      %336 = vmatprep.subr.mxu0 0.0
      %337 = vmatpush1.msra.mxu0 %v332
      %338 = vmatprep.subr.mxu0 0.0
      %339 = vmatpush1.msra.mxu0 0.0
      %340 = vmatprep.subr.mxu0 0.0
      %341 = vmatpush1.msra.mxu0 0.0
      %342 = vmatprep.subr.mxu0 0.0
      %343 = vmatpush1.msra.mxu0 0.0
      %344 = vmatprep.subr.mxu0 0.0
      %345 = vmatpush1.msra.mxu0 0.0
      %346 = vmatprep.subr.mxu0 0.0
      %347 = vmatpush1.msra.mxu0 0.0
      %348 = vmatprep.subr.mxu0 0.0
      %349 = vmatpush1.msra.mxu0 0.0
      %350 = vmatprep.subr.mxu0 0.0
      %351 = vmatpush1.msra.mxu0 0.0
      %352 = vmatprep.subr.mxu0 0.0
      %353 = vmatpush1.msra.mxu0 0.0
      %354 = vmatprep.subr.mxu0 0.0
      %355 = vmatpush1.msra.mxu0 0.0
      %356 = vmatprep.subr.mxu0 0.0
      %357 = vmatpush1.msra.mxu0 0.0
      %358 = vmatprep.subr.mxu0 0.0
      %359 = vmatpush1.msra.mxu0 0.0
      %360 = vmatprep.subr.mxu0 0.0
      %361 = vmatpush1.msra.mxu0 0.0
      %362 = vmatprep.subr.mxu0 0.0
      %363 = vmatpush1.msra.mxu0 0.0
      %364 = vmatprep.subr.mxu0 0.0
      %365 = vmatpush1.msra.mxu0 0.0
      %366 = vmatprep.subr.mxu0 0.0
      %367 = vmatpush1.msra.mxu0 0.0
      %368 = vmatprep.subr.mxu0 0.0
      %369 = vmatpush1.msra.mxu0 0.0
      %370 = vmatprep.subr.mxu0 0.0
      %371 = vmatpush1.msra.mxu0 0.0
      %372 = vmatprep.subr.mxu0 0.0
      %373 = vmatpush1.msra.mxu0 0.0
      %374 = vmatprep.subr.mxu0 0.0
      %375 = vmatpush1.msra.mxu0 0.0
      %376 = vmatprep.subr.mxu0 0.0
      %377 = vmatpush1.msra.mxu0 0.0
      %378 = vmatprep.subr.mxu0 0.0
      %379 = vmatpush1.msra.mxu0 0.0
      %380 = vmatprep.subr.mxu0 0.0
      %381 = vmatpush1.msra.mxu0 0.0
      %382 = vmatprep.subr.mxu0 0.0
      %383 = vmatpush1.msra.mxu0 0.0
      %384 = vmatprep.subr.mxu0 0.0
      %385 = vmatpush1.msra.mxu0 0.0
      %386 = vmatprep.subr.mxu0 0.0
      %387 = vmatpush1.msra.mxu0 0.0
      %388 = vmatprep.subr.mxu0 0.0
      %389 = vmatpush1.msra.mxu0 0.0
      %390 = vmatprep.subr.mxu0 0.0
      %391 = vmatpush1.msra.mxu0 0.0
      %392 = vmatprep.subr.mxu0 0.0
      %393 = vmatpush1.msra.mxu0 0.0
      %394 = vmatprep.subr.mxu0 0.0
      %395 = vmatpush1.msra.mxu0 0.0
      %396 = vmatprep.subr.mxu0 0.0
      %397 = vmatpush1.msra.mxu0 0.0
      %398 = vmatprep.mubr.f32.mxu0 0.0
      %399 = vmatmul.mubr.f32.gmra.mrb[0].mxu0 %v325
      %v400 = vpop.f32.mrb[0].mxu0
      %v401 = vadd.f32 %v321, %v400
      %v402 = vpop.f32.mrb[0].mxu0
      %403 = vmatprep.mubr.f32.mxu0 0.0
      %404 = vmatmul.mubr.f32.gmra.mrb[0].mxu0 %v328
      %v405 = vpop.f32.mrb[0].mxu0
      %v406 = vadd.f32 %v321, %v405
      %v407 = vpop.f32.mrb[0].mxu0
      %408 = vdwg.mxu0
      %v409 = vmax.f32 %v401, 0.0
      %v410 = vmax.f32 %v406, 0.0
      %v411 = vlaneseq
      %v412 = vshrl.u32 %v411, 7
      %v413 = vadd.s32 %v412, 8
      %s414 = smul.u32 %s22, 8
      %s415 = ssub.s32 %s414, 1
      %v416 = vstv %s415
      %v417 = vadd.s32 %v416, %v412
      %v418 = vadd.s32 %v416, %v413
      %vm419 = vcmp.ge.s32.totalorder %v417, 0
      %vm420 = vcmp.ge.s32.totalorder %v418, 0
      %vm421 = vcmp.lt.s32.totalorder %v417, 8
      %vm422 = vcmp.lt.s32.totalorder %v418, 8
      %vm423 = vmand %vm419, %vm421
      %vm424 = vmand %vm420, %vm422
      %v425 = vsel %vm423, 1, 0
      %v426 = vsel %vm424, 1, 0
      %vm427 = vcmp.eq.s32.totalorder %v425, 1
      %vm428 = vcmp.eq.s32.totalorder %v426, 1
      %v429 = vsel %vm427, %v409, 0.0
      %v430 = vsel %vm428, %v410, 0.0
      %v431 = vld [vmem:[%s3] sm:$0xff]
      %s432 = scalar_lea.vmem %s3, 8
      %v433 = vld [vmem:[%s432] sm:$0xff]
      %vm436 = vcmask 1046528
      %v437 = vrot.slane %v429, 1
      %v438 = vrot.slane %v430, 1
      %v439 = vsel %vm436, %v437, %v438
      %vm440 = vcmask 64512
      %v441 = vsel %vm440, %v439, 0
      %443 = vmatprep.subr.mxu0 0.0
      %444 = vmatpush1.msra.mxu0 %v433
      %445 = vmatprep.subr.mxu0 0.0
      %446 = vmatpush1.msra.mxu0 0.0
      %447 = vmatprep.subr.mxu0 0.0
      %448 = vmatpush1.msra.mxu0 0.0
      %449 = vmatprep.subr.mxu0 0.0
      %450 = vmatpush1.msra.mxu0 0.0
      %451 = vmatprep.subr.mxu0 0.0
      %452 = vmatpush1.msra.mxu0 0.0
      %453 = vmatprep.subr.mxu0 0.0
      %454 = vmatpush1.msra.mxu0 0.0
      %455 = vmatprep.subr.mxu0 0.0
      %456 = vmatpush1.msra.mxu0 0.0
      %457 = vmatprep.subr.mxu0 0.0
      %458 = vmatpush1.msra.mxu0 0.0
      %459 = vmatprep.subr.mxu0 0.0
      %460 = vmatpush1.msra.mxu0 0.0
      %461 = vmatprep.subr.mxu0 0.0
      %462 = vmatpush1.msra.mxu0 0.0
      %463 = vmatprep.subr.mxu0 0.0
      %464 = vmatpush1.msra.mxu0 0.0
      %465 = vmatprep.subr.mxu0 0.0
      %466 = vmatpush1.msra.mxu0 0.0
      %467 = vmatprep.subr.mxu0 0.0
      %468 = vmatpush1.msra.mxu0 0.0
      %469 = vmatprep.subr.mxu0 0.0
      %470 = vmatpush1.msra.mxu0 0.0
      %471 = vmatprep.subr.mxu0 0.0
      %472 = vmatpush1.msra.mxu0 0.0
      %473 = vmatprep.subr.mxu0 0.0
      %474 = vmatpush1.msra.mxu0 0.0
      %475 = vmatprep.subr.mxu0 0.0
      %476 = vmatpush1.msra.mxu0 0.0
      %477 = vmatprep.subr.mxu0 0.0
      %478 = vmatpush1.msra.mxu0 0.0
      %479 = vmatprep.subr.mxu0 0.0
      %480 = vmatpush1.msra.mxu0 0.0
      %481 = vmatprep.subr.mxu0 0.0
      %482 = vmatpush1.msra.mxu0 0.0
      %483 = vmatprep.subr.mxu0 0.0
      %484 = vmatpush1.msra.mxu0 0.0
      %485 = vmatprep.subr.mxu0 0.0
      %486 = vmatpush1.msra.mxu0 0.0
      %487 = vmatprep.subr.mxu0 0.0
      %488 = vmatpush1.msra.mxu0 0.0
      %489 = vmatprep.subr.mxu0 0.0
      %490 = vmatpush1.msra.mxu0 0.0
      %491 = vmatprep.subr.mxu0 0.0
      %492 = vmatpush1.msra.mxu0 0.0
      %493 = vmatprep.subr.mxu0 0.0
      %494 = vmatpush1.msra.mxu0 0.0
      %495 = vmatprep.subr.mxu0 0.0
      %496 = vmatpush1.msra.mxu0 0.0
      %497 = vmatprep.subr.mxu0 0.0
      %498 = vmatpush1.msra.mxu0 0.0
      %499 = vmatprep.subr.mxu0 0.0
      %500 = vmatpush1.msra.mxu0 0.0
      %501 = vmatprep.subr.mxu0 0.0
      %502 = vmatpush1.msra.mxu0 0.0
      %503 = vmatprep.subr.mxu0 0.0
      %504 = vmatpush1.msra.mxu0 0.0
      %505 = vmatprep.subr.mxu0 0.0
      %506 = vmatpush1.msra.mxu0 0.0
      %507 = vmatprep.mubr.f32.mxu0 0.0
      %508 = vmatmul.mubr.f32.gmra.mrb[0].mxu0 %v441
      %v509 = vpop.f32.mrb[0].mxu0
      %v510 = vadd.f32 0.0, %v509
      %v511 = vpop.f32.mrb[0].mxu0
      %512 = vdwg.mxu0
      %v513 = vsel %vm440, %v429, 0
      %515 = vmatprep.subr.mxu0 0.0
      %516 = vmatpush1.msra.mxu0 %v431
      %517 = vmatprep.subr.mxu0 0.0
      %518 = vmatpush1.msra.mxu0 0.0
      %519 = vmatprep.subr.mxu0 0.0
      %520 = vmatpush1.msra.mxu0 0.0
      %521 = vmatprep.subr.mxu0 0.0
      %522 = vmatpush1.msra.mxu0 0.0
      %523 = vmatprep.subr.mxu0 0.0
      %524 = vmatpush1.msra.mxu0 0.0
      %525 = vmatprep.subr.mxu0 0.0
      %526 = vmatpush1.msra.mxu0 0.0
      %527 = vmatprep.subr.mxu0 0.0
      %528 = vmatpush1.msra.mxu0 0.0
      %529 = vmatprep.subr.mxu0 0.0
      %530 = vmatpush1.msra.mxu0 0.0
      %531 = vmatprep.subr.mxu0 0.0
      %532 = vmatpush1.msra.mxu0 0.0
      %533 = vmatprep.subr.mxu0 0.0
      %534 = vmatpush1.msra.mxu0 0.0
      %535 = vmatprep.subr.mxu0 0.0
      %536 = vmatpush1.msra.mxu0 0.0
      %537 = vmatprep.subr.mxu0 0.0
      %538 = vmatpush1.msra.mxu0 0.0
      %539 = vmatprep.subr.mxu0 0.0
      %540 = vmatpush1.msra.mxu0 0.0
      %541 = vmatprep.subr.mxu0 0.0
      %542 = vmatpush1.msra.mxu0 0.0
      %543 = vmatprep.subr.mxu0 0.0
      %544 = vmatpush1.msra.mxu0 0.0
      %545 = vmatprep.subr.mxu0 0.0
      %546 = vmatpush1.msra.mxu0 0.0
      %547 = vmatprep.subr.mxu0 0.0
      %548 = vmatpush1.msra.mxu0 0.0
      %549 = vmatprep.subr.mxu0 0.0
      %550 = vmatpush1.msra.mxu0 0.0
      %551 = vmatprep.subr.mxu0 0.0
      %552 = vmatpush1.msra.mxu0 0.0
      %553 = vmatprep.subr.mxu0 0.0
      %554 = vmatpush1.msra.mxu0 0.0
      %555 = vmatprep.subr.mxu0 0.0
      %556 = vmatpush1.msra.mxu0 0.0
      %557 = vmatprep.subr.mxu0 0.0
      %558 = vmatpush1.msra.mxu0 0.0
      %559 = vmatprep.subr.mxu0 0.0
      %560 = vmatpush1.msra.mxu0 0.0
      %561 = vmatprep.subr.mxu0 0.0
      %562 = vmatpush1.msra.mxu0 0.0
      %563 = vmatprep.subr.mxu0 0.0
      %564 = vmatpush1.msra.mxu0 0.0
      %565 = vmatprep.subr.mxu0 0.0
      %566 = vmatpush1.msra.mxu0 0.0
      %567 = vmatprep.subr.mxu0 0.0
      %568 = vmatpush1.msra.mxu0 0.0
      %569 = vmatprep.subr.mxu0 0.0
      %570 = vmatpush1.msra.mxu0 0.0
      %571 = vmatprep.subr.mxu0 0.0
      %572 = vmatpush1.msra.mxu0 0.0
      %573 = vmatprep.subr.mxu0 0.0
      %574 = vmatpush1.msra.mxu0 0.0
      %575 = vmatprep.subr.mxu0 0.0
      %576 = vmatpush1.msra.mxu0 0.0
      %577 = vmatprep.subr.mxu0 0.0
      %578 = vmatpush1.msra.mxu0 0.0
      %579 = vmatprep.mubr.f32.mxu0 0.0
      %580 = vmatmul.mubr.f32.gmra.mrb[0].mxu0 %v513
      %v581 = vpop.f32.mrb[0].mxu0
      %v582 = vadd.f32 %v510, %v581
      %v583 = vpop.f32.mrb[0].mxu0
      %584 = vdwg.mxu0
      %s585 = scalar_lea.vmem %s3, 16
      %v586 = vld [vmem:[%s585] sm:$0xff]
      %vm587 = vcmask 1045504
      %v588 = vrot.slane %v429, 2
      %v589 = vrot.slane %v430, 2
      %v590 = vsel %vm587, %v588, %v589
      %v591 = vsel %vm440, %v590, 0
      %593 = vmatprep.subr.mxu0 0.0
      %594 = vmatpush1.msra.mxu0 %v586
      %595 = vmatprep.subr.mxu0 0.0
      %596 = vmatpush1.msra.mxu0 0.0
      %597 = vmatprep.subr.mxu0 0.0
      %598 = vmatpush1.msra.mxu0 0.0
      %599 = vmatprep.subr.mxu0 0.0
      %600 = vmatpush1.msra.mxu0 0.0
      %601 = vmatprep.subr.mxu0 0.0
      %602 = vmatpush1.msra.mxu0 0.0
      %603 = vmatprep.subr.mxu0 0.0
      %604 = vmatpush1.msra.mxu0 0.0
      %605 = vmatprep.subr.mxu0 0.0
      %606 = vmatpush1.msra.mxu0 0.0
      %607 = vmatprep.subr.mxu0 0.0
      %608 = vmatpush1.msra.mxu0 0.0
      %609 = vmatprep.subr.mxu0 0.0
      %610 = vmatpush1.msra.mxu0 0.0
      %611 = vmatprep.subr.mxu0 0.0
      %612 = vmatpush1.msra.mxu0 0.0
      %613 = vmatprep.subr.mxu0 0.0
      %614 = vmatpush1.msra.mxu0 0.0
      %615 = vmatprep.subr.mxu0 0.0
      %616 = vmatpush1.msra.mxu0 0.0
      %617 = vmatprep.subr.mxu0 0.0
      %618 = vmatpush1.msra.mxu0 0.0
      %619 = vmatprep.subr.mxu0 0.0
      %620 = vmatpush1.msra.mxu0 0.0
      %621 = vmatprep.subr.mxu0 0.0
      %622 = vmatpush1.msra.mxu0 0.0
      %623 = vmatprep.subr.mxu0 0.0
      %624 = vmatpush1.msra.mxu0 0.0
      %625 = vmatprep.subr.mxu0 0.0
      %626 = vmatpush1.msra.mxu0 0.0
      %627 = vmatprep.subr.mxu0 0.0
      %628 = vmatpush1.msra.mxu0 0.0
      %629 = vmatprep.subr.mxu0 0.0
      %630 = vmatpush1.msra.mxu0 0.0
      %631 = vmatprep.subr.mxu0 0.0
      %632 = vmatpush1.msra.mxu0 0.0
      %633 = vmatprep.subr.mxu0 0.0
      %634 = vmatpush1.msra.mxu0 0.0
      %635 = vmatprep.subr.mxu0 0.0
      %636 = vmatpush1.msra.mxu0 0.0
      %637 = vmatprep.subr.mxu0 0.0
      %638 = vmatpush1.msra.mxu0 0.0
      %639 = vmatprep.subr.mxu0 0.0
      %640 = vmatpush1.msra.mxu0 0.0
      %641 = vmatprep.subr.mxu0 0.0
      %642 = vmatpush1.msra.mxu0 0.0
      %643 = vmatprep.subr.mxu0 0.0
      %644 = vmatpush1.msra.mxu0 0.0
      %645 = vmatprep.subr.mxu0 0.0
      %646 = vmatpush1.msra.mxu0 0.0
      %647 = vmatprep.subr.mxu0 0.0
      %648 = vmatpush1.msra.mxu0 0.0
      %649 = vmatprep.subr.mxu0 0.0
      %650 = vmatpush1.msra.mxu0 0.0
      %651 = vmatprep.subr.mxu0 0.0
      %652 = vmatpush1.msra.mxu0 0.0
      %653 = vmatprep.subr.mxu0 0.0
      %654 = vmatpush1.msra.mxu0 0.0
      %655 = vmatprep.subr.mxu0 0.0
      %656 = vmatpush1.msra.mxu0 0.0
      %657 = vmatprep.mubr.f32.mxu0 0.0
      %658 = vmatmul.mubr.f32.gmra.mrb[0].mxu0 %v591
      %v659 = vpop.f32.mrb[0].mxu0
      %v660 = vadd.f32 0.0, %v659
      %v661 = vpop.f32.mrb[0].mxu0
      %662 = vdwg.mxu0
      %v663 = vadd.f32 %v582, %v660
      %v664 = vld [vmem:[%s4] sm:$0x1]
      %v666 = vlaneseq
      %v667 = vshrl.u32 %v666, 7
      %v668 = vsub.s32 0, %v667
      %v669 = vrot.slane %v664, %v668
      %v671 = vadd.f32 %v663, %v669
      %v672 = vld [vmem:[%s304] sm:$0xff]
      %v673 = vadd.f32 %v671, %v672
      %674 = vst.msk [vmem:[%s311] sm:$0xff] %vm440, %v673
      %p675 = scmp.lt.s32.totalorder %s21, 1
      %s676 = scalar_select %p675, %s21, 1
      %p677 = scmp.lt.s32.totalorder %s22, 0
      %s678 = scalar_select %p677, %s22, 0
      %s679 = sadd.s32 %s678, %s676
      %s680 = smul.addr %s679, 8
      %s681 = scalar_lea.vmem %s6, %s680
      // Predicated region
      $region45: #{basic_block_forward.1} parent=43 // pred_check
        %p682 = pneg %p189
      $region46: #{basic_block_forward.1} parent=43 // pred_check_branch
        %684 = sbr.rel (%p682) target = $region48
      $region47: #{basic_block_forward.1} parent=43 // pred_region
        _
      $region48: #{basic_block_forward.1} parent=43 // pred_fallthru
        _
    $region44: #{basic_block_forward.1} parent=5 // pred_fallthru
      _
    %p685 = scmp.le.s32.totalorder 2, %s12
    // Predicated region
    $region49: #{basic_block_forward.1} parent=5 // pred_check
      %p686 = pneg %p685
    $region50: #{basic_block_forward.1} parent=5 // pred_check_branch
      %688 = sbr.rel (%p686) target = $region52
    $region51: #{basic_block_forward.1} parent=5 // pred_region
      %s689 = ssub.s32 %s12, 2
      // Predicated region
      $region53: #{basic_block_forward.1} parent=51 // pred_check
        %p690 = pneg %p195
      $region54: #{basic_block_forward.1} parent=51 // pred_check_branch
        %692 = sbr.rel (%p690) target = $region56
      $region55: #{basic_block_forward.1} parent=51 // pred_region
        %p693 = scmp.lt.s32.totalorder %s23, 1
        %s694 = scalar_select %p693, %s23, 1
        %p695 = scmp.lt.s32.totalorder %s24, 0
        %s696 = scalar_select %p695, %s24, 0
        %s697 = sadd.s32 %s696, %s694
        %s698 = smul.addr %s697, 8
        %s699 = scalar_lea.vmem %s6, %s698
      $region56: #{basic_block_forward.1} parent=51 // pred_fallthru
        _
    $region52: #{basic_block_forward.1} parent=5 // pred_fallthru
      _
  $region6: #{basic_block_forward.1} parent=0 // loop_footer
    %s16 = sadd.s32 1, %s12
  $region7: #{basic_block_forward.1} parent=0 // loop_footer_branch
    %11 = sbr.rel target = $region3
  $region8: #{basic_block_forward.1} parent=0 // loop_exit
    _

</llo_original>
